<compile_context>
chip_gen: v6e
topology: v6e:2x2x1
jax: 0.10.0
libtpu: 0.0.40
codegen_flags: <defaults>
</compile_context>

<pallas_src>
import math

import jax
import jax.numpy as jnp
from jax.experimental import pallas as pl
from jax.experimental.pallas import tpu as pltpu


def _weightgen_kernel(wl_smem, subset_ref, w_ref, b_ref, o_ref):
    # wl_smem:    (L,)  f32 scalars in SMEM (scalar prefetch)
    # subset_ref: (L, tm, tn) VMEM tile
    # w_ref/b_ref/o_ref: (tm, tn) VMEM tiles
    L = subset_ref.shape[0]
    # Unrolled scalar * vector FMA chain over the tiny adjacent-layer axis.
    acc = subset_ref[0].astype(jnp.float32) * wl_smem[0]
    for l in range(1, L):
        acc += subset_ref[l].astype(jnp.float32) * wl_smem[l]
    out = jnp.tanh(acc) * w_ref[...].astype(jnp.float32) + b_ref[...].astype(jnp.float32)
    o_ref[...] = out.astype(o_ref.dtype)


def _tpu_budget_and_cores():
    """(vmem_working_set_budget_bytes, vmem_limit_cap_bytes, num_tensorcores).

    Robust to introspection failures: falls back to the most restrictive
    physical VMEM (v7x: 64 MiB per TC) and a single TensorCore.
    """
    phys = None
    try:
        phys = int(pltpu.get_tpu_info().vmem_capacity_bytes)
    except Exception:
        phys = None
    if not phys or phys <= 0:
        phys = 64 << 20  # v7x per-TC physical; safe lower bound

    num_tc = 1
    try:
        kind = jax.devices()[0].device_kind.lower()
        if "v7" in kind or "7x" in kind:
            num_tc = 2
    except Exception:
        pass

    # Double-buffered working-set budget: ~40% of physical, capped at 28 MiB —
    # large enough to amortize the ~0.35 us/grid-step overhead on every
    # generation while leaving plenty of headroom for compiler scratch.
    budget = min(28 << 20, (phys * 2) // 5)
    limit_cap = phys - (8 << 20)
    return budget, limit_cap, num_tc


def _choose_tiles(L, OUT, IN, itemsizes, vmem_budget_bytes, num_tensorcores):
    """Pick (tm, tn). tn = full row (lane-dense) unless that blows the budget
    even at 8 rows; tm is as big as the double-buffered budget allows."""
    sub_isz, w_isz, b_isz, o_isz = itemsizes
    bytes_per_elem_db = 2 * (L * sub_isz + w_isz + b_isz + o_isz)  # double-buffered
    min_rows = OUT if OUT < 8 else 8

    # Lane axis: prefer the full last dim (unmasked full-row stores).  Only
    # split (into multiples of 128, preserving lane-density) if even an
    # 8-row tile would exceed the budget on a very wide IN.
    tn = IN
    if IN > 128 and bytes_per_elem_db * min_rows * IN > vmem_budget_bytes:
        tn = (vmem_budget_bytes // (bytes_per_elem_db * min_rows)) // 128 * 128
        tn = int(max(128, min(tn, (IN // 128) * 128)))

    # Sublane axis: as many rows as the budget allows.
    tm = max(min_rows, vmem_budget_bytes // (bytes_per_elem_db * tn))

    # Megacore split only on 2-TC chips (v7x), and only when each per-TC block
    # still carries meaningful traffic (>= ~2 MiB); otherwise a single block
    # avoids pure per-step overhead (v5e/v6e are single-TC: never split).
    if num_tensorcores >= 2 and OUT >= 16:
        half = max(8, (OUT // 2 // 8) * 8)
        per_block_bytes = (L * sub_isz + w_isz + b_isz + o_isz) * half * tn
        if per_block_bytes >= (2 << 20):
            tm = min(tm, half)

    tm = min(tm, OUT)
    if tm != OUT:
        tm = max(min_rows, (tm // 8) * 8)
    return int(tm), int(tn)


def weight_generator_forward(subset_l_oi, w_l, W, B, *, tm=None, tn=None):
    """subset_l_oi: (L, OUT, IN); w_l: (L,) or (L,1); W, B: (OUT, IN) -> (OUT, IN) f32.

    Partial edge blocks are safe: the op is elementwise over (OUT, IN) (the
    L-contraction lies entirely inside each block), and Pallas masks
    out-of-bounds output stores.
    """
    L, OUT, IN = subset_l_oi.shape
    assert W.shape == (OUT, IN) and B.shape == (OUT, IN)

    budget, limit_cap, num_tc = _tpu_budget_and_cores()
    itemsizes = (
        jnp.dtype(subset_l_oi.dtype).itemsize,
        jnp.dtype(W.dtype).itemsize,
        jnp.dtype(B.dtype).itemsize,
        4,  # f32 output
    )
    tm_auto, tn_auto = _choose_tiles(L, OUT, IN, itemsizes, budget, num_tc)
    tm = tm_auto if tm is None else tm
    tn = tn_auto if tn is None else tn

    wl = jnp.reshape(w_l, (L,)).astype(jnp.float32)

    sub_isz, w_isz, b_isz, o_isz = itemsizes
    bytes_per_elem = L * sub_isz + w_isz + b_isz + o_isz
    working_set = 2 * bytes_per_elem * tm * tn                 # double-buffered
    vmem_limit = int(min(limit_cap, max(16 << 20, working_set + (4 << 20))))

    cost = pl.CostEstimate(
        flops=2 * L * OUT * IN + 2 * OUT * IN,   # FMAs over L + scale/shift
        transcendentals=OUT * IN,                # tanh
        bytes_accessed=bytes_per_elem * OUT * IN,
    )

    if tn == IN:
        # Full-row tiles: drop the degenerate lane grid axis -> 1-D grid.
        grid = (pl.cdiv(OUT, tm),)
        in_specs = [
            pl.BlockSpec((L, tm, tn), lambda i, wl_ref: (0, i, 0)),   # subset
            pl.BlockSpec((tm, tn), lambda i, wl_ref: (i, 0)),         # W
            pl.BlockSpec((tm, tn), lambda i, wl_ref: (i, 0)),         # B
        ]
        out_specs = pl.BlockSpec((tm, tn), lambda i, wl_ref: (i, 0))
        dims = ("parallel",)
    else:
        grid = (pl.cdiv(OUT, tm), pl.cdiv(IN, tn))
        in_specs = [
            pl.BlockSpec((L, tm, tn), lambda i, j, wl_ref: (0, i, j)),
            pl.BlockSpec((tm, tn), lambda i, j, wl_ref: (i, j)),
            pl.BlockSpec((tm, tn), lambda i, j, wl_ref: (i, j)),
        ]
        out_specs = pl.BlockSpec((tm, tn), lambda i, j, wl_ref: (i, j))
        dims = ("parallel", "parallel")

    return pl.pallas_call(
        _weightgen_kernel,
        out_shape=jax.ShapeDtypeStruct((OUT, IN), jnp.float32),
        grid_spec=pltpu.PrefetchScalarGridSpec(
            num_scalar_prefetch=1,               # w_l -> SMEM scalars
            grid=grid,
            in_specs=in_specs,
            out_specs=out_specs,
        ),
        compiler_params=pltpu.CompilerParams(
            dimension_semantics=dims,
            vmem_limit_bytes=vmem_limit,
        ),
        cost_estimate=cost,
    )(wl, subset_l_oi, W, B)


if __name__ == "__main__":
    # Small shapes consistent with the module:
    #   teacher_weight_out = student_weight_out = 64
    #   teacher_weight_in  = student_weight_in  = 128
    #   num_adjacent_layers L = 4   (teacher_layers / num_student_layers)
    OUT, IN, L = 64, 128, 4

    key = jax.random.PRNGKey(0)
    k_subset, k_wl = jax.random.split(key)

    # Teacher weight subset, produced directly in the kernel layout
    # (L, OUT, IN) — no glue transpose of the dominant tensor.
    subset_l_oi = jax.random.normal(k_subset, (L, OUT, IN), dtype=jnp.float32)

    # W_l ~ xavier_uniform_ on shape (L, 1): bound = sqrt(6 / (fan_in + fan_out))
    bound = math.sqrt(6.0 / (L + 1))
    W_l = jax.random.uniform(k_wl, (L,), dtype=jnp.float32,
                             minval=-bound, maxval=bound)

    # W = ones, B = zeros  (as in __init__)
    W = jnp.ones((OUT, IN), dtype=jnp.float32)
    B = jnp.zeros((OUT, IN), dtype=jnp.float32)

    out = weight_generator_forward(subset_l_oi, W_l, W, B)
    out = jax.block_until_ready(out)

    # Plain-JAX reference mirroring the PyTorch forward
    # (subset.matmul(W_l).squeeze(-1) == contraction over the L axis).
    ref = jnp.tanh(jnp.einsum("loi,l->oi", subset_l_oi, W_l)) * W + B
    assert out.shape == (OUT, IN)
    assert jnp.allclose(out, ref, atol=1e-5, rtol=1e-5)

    print("KERNEL_OK")
</pallas_src>

<mosaic_0001>
module attributes {stable_mosaic.version = 11 : i64} {
  func.func @_weightgen_kernel(%arg0: i32, %arg1: memref<4xf32, #tpu.memory_space<smem>>, %arg2: memref<4x64x128xf32, #tpu.memory_space<vmem>>, %arg3: memref<64x128xf32, #tpu.memory_space<vmem>>, %arg4: memref<64x128xf32, #tpu.memory_space<vmem>>, %arg5: memref<64x128xf32, #tpu.memory_space<vmem>>) attributes {dimension_semantics = [#tpu.dimension_semantics<parallel>], iteration_bounds = array<i64: 1>, scalar_prefetch = 1 : i64, scratch_operands = 0 : i64, tpu.core_type = #tpu.core_type<tc>, window_params = [{transform_indices = @transform_0, window_bounds = array<i64: 4, 64, 128>}, {transform_indices = @transform_1, window_bounds = array<i64: 64, 128>}, {transform_indices = @transform_2, window_bounds = array<i64: 64, 128>}, {transform_indices = @transform_3, window_bounds = array<i64: 64, 128>}]} {
    %c0 = arith.constant 0 : index
    %c0_0 = arith.constant 0 : index
    %c0_1 = arith.constant 0 : index
    %0 = vector.load %arg2[%c0, %c0_0, %c0_1] : memref<4x64x128xf32, #tpu.memory_space<vmem>>, vector<1x64x128xf32>
    %1 = vector.shape_cast %0 : vector<1x64x128xf32> to vector<64x128xf32>
    %c0_2 = arith.constant 0 : index
    %2 = memref.load %arg1[%c0_2] : memref<4xf32, #tpu.memory_space<smem>>
    %3 = vector.broadcast %2 : f32 to vector<64x128xf32>
    %4 = arith.mulf %1, %3 : vector<64x128xf32>
    %c1 = arith.constant 1 : index
    %c0_3 = arith.constant 0 : index
    %c0_4 = arith.constant 0 : index
    %5 = vector.load %arg2[%c1, %c0_3, %c0_4] : memref<4x64x128xf32, #tpu.memory_space<vmem>>, vector<1x64x128xf32>
    %6 = vector.shape_cast %5 : vector<1x64x128xf32> to vector<64x128xf32>
    %c1_5 = arith.constant 1 : index
    %7 = memref.load %arg1[%c1_5] : memref<4xf32, #tpu.memory_space<smem>>
    %8 = vector.broadcast %7 : f32 to vector<64x128xf32>
    %9 = arith.mulf %6, %8 : vector<64x128xf32>
    %10 = arith.addf %4, %9 : vector<64x128xf32>
    %c2 = arith.constant 2 : index
    %c0_6 = arith.constant 0 : index
    %c0_7 = arith.constant 0 : index
    %11 = vector.load %arg2[%c2, %c0_6, %c0_7] : memref<4x64x128xf32, #tpu.memory_space<vmem>>, vector<1x64x128xf32>
    %12 = vector.shape_cast %11 : vector<1x64x128xf32> to vector<64x128xf32>
    %c2_8 = arith.constant 2 : index
    %13 = memref.load %arg1[%c2_8] : memref<4xf32, #tpu.memory_space<smem>>
    %14 = vector.broadcast %13 : f32 to vector<64x128xf32>
    %15 = arith.mulf %12, %14 : vector<64x128xf32>
    %16 = arith.addf %10, %15 : vector<64x128xf32>
    %c3 = arith.constant 3 : index
    %c0_9 = arith.constant 0 : index
    %c0_10 = arith.constant 0 : index
    %17 = vector.load %arg2[%c3, %c0_9, %c0_10] : memref<4x64x128xf32, #tpu.memory_space<vmem>>, vector<1x64x128xf32>
    %18 = vector.shape_cast %17 : vector<1x64x128xf32> to vector<64x128xf32>
    %c3_11 = arith.constant 3 : index
    %19 = memref.load %arg1[%c3_11] : memref<4xf32, #tpu.memory_space<smem>>
    %20 = vector.broadcast %19 : f32 to vector<64x128xf32>
    %21 = arith.mulf %18, %20 : vector<64x128xf32>
    %22 = arith.addf %16, %21 : vector<64x128xf32>
    %23 = math.tanh %22 : vector<64x128xf32>
    %c0_12 = arith.constant 0 : index
    %c0_13 = arith.constant 0 : index
    %24 = vector.load %arg3[%c0_12, %c0_13] : memref<64x128xf32, #tpu.memory_space<vmem>>, vector<64x128xf32>
    %25 = arith.mulf %23, %24 : vector<64x128xf32>
    %c0_14 = arith.constant 0 : index
    %c0_15 = arith.constant 0 : index
    %26 = vector.load %arg4[%c0_14, %c0_15] : memref<64x128xf32, #tpu.memory_space<vmem>>, vector<64x128xf32>
    %27 = arith.addf %25, %26 : vector<64x128xf32>
    %c0_16 = arith.constant 0 : index
    %c0_17 = arith.constant 0 : index
    %28 = vector.load %arg5[%c0_16, %c0_17] : memref<64x128xf32, #tpu.memory_space<vmem>>, vector<64x128xf32>
    tpu.vector_store %arg5[%c0_16, %c0_17], %27 {strides = array<i32>} : memref<64x128xf32, #tpu.memory_space<vmem>>, vector<64x128xf32>,
    return
  }
  func.func @transform_0(%arg0: i32, %arg1: memref<4xf32, #tpu.memory_space<smem>>) -> (i32, i32, i32) {
    %c0_i32 = arith.constant 0 : i32
    %c0_i32_0 = arith.constant 0 : i32
    %c0_i32_1 = arith.constant 0 : i32
    return %c0_i32, %arg0, %c0_i32_0 : i32, i32, i32
  }
  func.func @transform_1(%arg0: i32, %arg1: memref<4xf32, #tpu.memory_space<smem>>) -> (i32, i32) {
    %c0_i32 = arith.constant 0 : i32
    %c0_i32_0 = arith.constant 0 : i32
    return %arg0, %c0_i32 : i32, i32
  }
  func.func @transform_2(%arg0: i32, %arg1: memref<4xf32, #tpu.memory_space<smem>>) -> (i32, i32) {
    %c0_i32 = arith.constant 0 : i32
    %c0_i32_0 = arith.constant 0 : i32
    return %arg0, %c0_i32 : i32, i32
  }
  func.func @transform_3(%arg0: i32, %arg1: memref<4xf32, #tpu.memory_space<smem>>) -> (i32, i32) {
    %c0_i32 = arith.constant 0 : i32
    %c0_i32_0 = arith.constant 0 : i32
    return %arg0, %c0_i32 : i32, i32
  }
}

</mosaic_0001>

<llo_original>
// kernel: tpu_custom_call.1
$region0: #{tpu_custom_call.1}
  #allocation0 [shape = 'u32[]', space=smem, size = 0x4, offset = 0x4, fixed_abs, tag = 'smem constant byte address 0x4 - core index']
  #allocation1 [shape = 'u32[144,128]{1,0:T(1,128)}', space=vmem, size = 0x12000, scoped, tag = 'internal scratch']
  #allocation2 [shape = 's32[1]{0}', space=sflag, size = 0x4, scoped, tag = 'scoped memory for tpu_custom_call.1']
  #allocation3 [shape = 'u8[512]{0}', space=smem, size = 0x200, scoped, tag = 'prefetched SMEM operand 0']
  %s0 = inlined_call_operand.hbm [shape: f32[4], index: 0, kind: input, shape index: {}]
  %s1 = inlined_call_operand.hbm [shape: f32[4,64,128], index: 1, kind: input, shape index: {}]
  %s2 = inlined_call_operand.hbm [shape: f32[64,128], index: 2, kind: input, shape index: {}]
  %s3 = inlined_call_operand.hbm [shape: f32[64,128], index: 3, kind: input, shape index: {}]
  %s4 = inlined_call_operand.hbm [shape: f32[64,128], index: 4, kind: output, shape index: {}]
  %s5 = sld [smem:[#allocation0]]
  $region34: #{tpu_custom_call.1} parent=0
    _
  %s7 = ssub.s32 1, %s5
  %s8 = scalar_select 0, %s7, %s5
  %10 = dma.hbm_to_smem %s0, 16, [#allocation3], [#allocation2]
  %11 = dma.done [#allocation2], 16
  %12 = sfence
  $region1: #{tpu_custom_call.1} parent=0
    #allocation4 [shape = 'u8[131072]{0}', space=vmem, size = 0x20000, scoped, tag = 'input window, operand 1, single buffered']
    #allocation5 [shape = 's32[1]{0}', space=sflag, size = 0x4, scoped, tag = 'scoped memory for tpu_custom_call.1']
    #allocation6 [shape = 's32[1]{0}', space=sflag, size = 0x4, scoped, tag = 'scoped memory for tpu_custom_call.1']
    #allocation7 [shape = 'u8[32768]{0}', space=vmem, size = 0x8000, scoped, tag = 'input window, operand 2, single buffered']
    #allocation8 [shape = 's32[1]{0}', space=sflag, size = 0x4, scoped, tag = 'scoped memory for tpu_custom_call.1']
    #allocation9 [shape = 'u8[32768]{0}', space=vmem, size = 0x8000, scoped, tag = 'input window, operand 3, single buffered']
    #allocation10 [shape = 'u8[32768]{0}', space=vmem, size = 0x8000, scoped, tag = 'output window, operand 0, single buffered']
    %13 = vsyncpa [#allocation5], 0
    %14 = vsyncpa [#allocation8], 0
    %15 = vsyncpa [#allocation6], 0
    // Predicated region
    $region2: #{tpu_custom_call.1} parent=1 // pred_check
      _
    $region3: #{tpu_custom_call.1} parent=1 // pred_check_branch
      %17 = sbr.rel (0) target = $region5
    $region4: #{tpu_custom_call.1} parent=1 // pred_region
      %s19 = ssub.s32 4096, 4096
      %20 = vsyncadd [#allocation5], %s19
      %s21 = sshll.u32 [#allocation4], 4
      %s22 = int_to_ptr.vmem [resolvable:$true] %s21
      %27 = dma.hbm_to_vmem [thread:$0]  %s1, 4096, %s22, [#allocation5], 128, 128, 8
    $region5: #{tpu_custom_call.1} parent=1 // pred_fallthru
      _
    // Predicated region
    $region6: #{tpu_custom_call.1} parent=1 // pred_check
      _
    $region7: #{tpu_custom_call.1} parent=1 // pred_check_branch
      %29 = sbr.rel (0) target = $region9
    $region8: #{tpu_custom_call.1} parent=1 // pred_region
      %s31 = ssub.s32 1024, 1024
      %32 = vsyncadd [#allocation8], %s31
      %s33 = sshll.u32 [#allocation7], 4
      %s34 = int_to_ptr.vmem [resolvable:$true] %s33
      %39 = dma.hbm_to_vmem [thread:$0]  %s2, 1024, %s34, [#allocation8], 128, 128, 8
    $region9: #{tpu_custom_call.1} parent=1 // pred_fallthru
      _
    // Predicated region
    $region10: #{tpu_custom_call.1} parent=1 // pred_check
      _
    $region11: #{tpu_custom_call.1} parent=1 // pred_check_branch
      %41 = sbr.rel (0) target = $region13
    $region12: #{tpu_custom_call.1} parent=1 // pred_region
      %s43 = ssub.s32 1024, 1024
      %44 = vsyncadd [#allocation8], %s43
      %s45 = sshll.u32 [#allocation9], 4
      %s46 = int_to_ptr.vmem [resolvable:$true] %s45
      %51 = dma.hbm_to_vmem [thread:$0]  %s3, 1024, %s46, [#allocation8], 128, 128, 8
    $region13: #{tpu_custom_call.1} parent=1 // pred_fallthru
      _
    // Predicated region
    $region14: #{tpu_custom_call.1} parent=1 // pred_check
      _
    $region15: #{tpu_custom_call.1} parent=1 // pred_check_branch
      %53 = sbr.rel (0) target = $region17
    $region16: #{tpu_custom_call.1} parent=1 // pred_region
      %54 = dma.done [#allocation5], 4096
    $region17: #{tpu_custom_call.1} parent=1 // pred_fallthru
      _
    // Predicated region
    $region18: #{tpu_custom_call.1} parent=1 // pred_check
      _
    $region19: #{tpu_custom_call.1} parent=1 // pred_check_branch
      %56 = sbr.rel (0) target = $region21
    $region20: #{tpu_custom_call.1} parent=1 // pred_region
      %57 = dma.done [#allocation8], 1024
    $region21: #{tpu_custom_call.1} parent=1 // pred_fallthru
      _
    // Predicated region
    $region22: #{tpu_custom_call.1} parent=1 // pred_check
      _
    $region23: #{tpu_custom_call.1} parent=1 // pred_check_branch
      %59 = sbr.rel (0) target = $region25
    $region24: #{tpu_custom_call.1} parent=1 // pred_region
      %60 = dma.done [#allocation8], 1024
    $region25: #{tpu_custom_call.1} parent=1 // pred_fallthru
      _
    %v61 = vld [vmem:[#allocation4] sm:$0xff]
    %v62 = vld [vmem:[#allocation4 + $0x8] sm:$0xff]
    %v63 = vld [vmem:[#allocation4 + $0x10] sm:$0xff]
    %v64 = vld [vmem:[#allocation4 + $0x18] sm:$0xff]
    %v65 = vld [vmem:[#allocation4 + $0x20] sm:$0xff]
    %v66 = vld [vmem:[#allocation4 + $0x28] sm:$0xff]
    %v67 = vld [vmem:[#allocation4 + $0x30] sm:$0xff]
    %v68 = vld [vmem:[#allocation4 + $0x38] sm:$0xff]
    %s69 = sld [smem:[#allocation3]]
    %v70 = vstv %s69
    %v71 = vmul.f32 %v61, %v70
    %v72 = vmul.f32 %v62, %v70
    %v73 = vmul.f32 %v63, %v70
    %v74 = vmul.f32 %v64, %v70
    %v75 = vmul.f32 %v65, %v70
    %v76 = vmul.f32 %v66, %v70
    %v77 = vmul.f32 %v67, %v70
    %v78 = vmul.f32 %v68, %v70
    %s79 = scalar_lea.vmem [#allocation4], 64
    %v80 = vld [vmem:[%s79] sm:$0xff]
    %v81 = vld [vmem:[%s79 + $0x8] sm:$0xff]
    %v82 = vld [vmem:[%s79 + $0x10] sm:$0xff]
    %v83 = vld [vmem:[%s79 + $0x18] sm:$0xff]
    %v84 = vld [vmem:[%s79 + $0x20] sm:$0xff]
    %v85 = vld [vmem:[%s79 + $0x28] sm:$0xff]
    %v86 = vld [vmem:[%s79 + $0x30] sm:$0xff]
    %v87 = vld [vmem:[%s79 + $0x38] sm:$0xff]
    %s88 = sld [smem:[#allocation3 + $0x1]]
    %v89 = vstv %s88
    %v90 = vmul.f32 %v80, %v89
    %v91 = vmul.f32 %v81, %v89
    %v92 = vmul.f32 %v82, %v89
    %v93 = vmul.f32 %v83, %v89
    %v94 = vmul.f32 %v84, %v89
    %v95 = vmul.f32 %v85, %v89
    %v96 = vmul.f32 %v86, %v89
    %v97 = vmul.f32 %v87, %v89
    %v98 = vadd.f32 %v71, %v90
    %v99 = vadd.f32 %v72, %v91
    %v100 = vadd.f32 %v73, %v92
    %v101 = vadd.f32 %v74, %v93
    %v102 = vadd.f32 %v75, %v94
    %v103 = vadd.f32 %v76, %v95
    %v104 = vadd.f32 %v77, %v96
    %v105 = vadd.f32 %v78, %v97
    %s106 = scalar_lea.vmem [#allocation4], 128
    %v107 = vld [vmem:[%s106] sm:$0xff]
    %v108 = vld [vmem:[%s106 + $0x8] sm:$0xff]
    %v109 = vld [vmem:[%s106 + $0x10] sm:$0xff]
    %v110 = vld [vmem:[%s106 + $0x18] sm:$0xff]
    %v111 = vld [vmem:[%s106 + $0x20] sm:$0xff]
    %v112 = vld [vmem:[%s106 + $0x28] sm:$0xff]
    %v113 = vld [vmem:[%s106 + $0x30] sm:$0xff]
    %v114 = vld [vmem:[%s106 + $0x38] sm:$0xff]
    %s115 = sld [smem:[#allocation3 + $0x2]]
    %v116 = vstv %s115
    %v117 = vmul.f32 %v107, %v116
    %v118 = vmul.f32 %v108, %v116
    %v119 = vmul.f32 %v109, %v116
    %v120 = vmul.f32 %v110, %v116
    %v121 = vmul.f32 %v111, %v116
    %v122 = vmul.f32 %v112, %v116
    %v123 = vmul.f32 %v113, %v116
    %v124 = vmul.f32 %v114, %v116
    %v125 = vadd.f32 %v98, %v117
    %v126 = vadd.f32 %v99, %v118
    %v127 = vadd.f32 %v100, %v119
    %v128 = vadd.f32 %v101, %v120
    %v129 = vadd.f32 %v102, %v121
    %v130 = vadd.f32 %v103, %v122
    %v131 = vadd.f32 %v104, %v123
    %v132 = vadd.f32 %v105, %v124
    %s133 = scalar_lea.vmem [#allocation4], 192
    %v134 = vld [vmem:[%s133] sm:$0xff]
    %v135 = vld [vmem:[%s133 + $0x8] sm:$0xff]
    %v136 = vld [vmem:[%s133 + $0x10] sm:$0xff]
    %v137 = vld [vmem:[%s133 + $0x18] sm:$0xff]
    %v138 = vld [vmem:[%s133 + $0x20] sm:$0xff]
    %v139 = vld [vmem:[%s133 + $0x28] sm:$0xff]
    %v140 = vld [vmem:[%s133 + $0x30] sm:$0xff]
    %v141 = vld [vmem:[%s133 + $0x38] sm:$0xff]
    %s142 = sld [smem:[#allocation3 + $0x3]]
    %v143 = vstv %s142
    %v144 = vmul.f32 %v134, %v143
    %v145 = vmul.f32 %v135, %v143
    %v146 = vmul.f32 %v136, %v143
    %v147 = vmul.f32 %v137, %v143
    %v148 = vmul.f32 %v138, %v143
    %v149 = vmul.f32 %v139, %v143
    %v150 = vmul.f32 %v140, %v143
    %v151 = vmul.f32 %v141, %v143
    %v152 = vadd.f32 %v125, %v144
    %v153 = vadd.f32 %v126, %v145
    %v154 = vadd.f32 %v127, %v146
    %v155 = vadd.f32 %v128, %v147
    %v156 = vadd.f32 %v129, %v148
    %v157 = vadd.f32 %v130, %v149
    %v158 = vadd.f32 %v131, %v150
    %v159 = vadd.f32 %v132, %v151
    %v160 = vtanh.pop %v152
    %v161 = vtanh.pop %v153
    %v162 = vtanh.pop %v154
    %v163 = vtanh.pop %v155
    %v164 = vtanh.pop %v156
    %v165 = vtanh.pop %v157
    %v166 = vtanh.pop %v158
    %v167 = vtanh.pop %v159
    %v168 = vld [vmem:[#allocation7] sm:$0xff]
    %v169 = vld [vmem:[#allocation7 + $0x8] sm:$0xff]
    %v170 = vld [vmem:[#allocation7 + $0x10] sm:$0xff]
    %v171 = vld [vmem:[#allocation7 + $0x18] sm:$0xff]
    %v172 = vld [vmem:[#allocation7 + $0x20] sm:$0xff]
    %v173 = vld [vmem:[#allocation7 + $0x28] sm:$0xff]
    %v174 = vld [vmem:[#allocation7 + $0x30] sm:$0xff]
    %v175 = vld [vmem:[#allocation7 + $0x38] sm:$0xff]
    %v176 = vmul.f32 %v160, %v168
    %v177 = vmul.f32 %v161, %v169
    %v178 = vmul.f32 %v162, %v170
    %v179 = vmul.f32 %v163, %v171
    %v180 = vmul.f32 %v164, %v172
    %v181 = vmul.f32 %v165, %v173
    %v182 = vmul.f32 %v166, %v174
    %v183 = vmul.f32 %v167, %v175
    %v184 = vld [vmem:[#allocation9] sm:$0xff]
    %v185 = vld [vmem:[#allocation9 + $0x8] sm:$0xff]
    %v186 = vld [vmem:[#allocation9 + $0x10] sm:$0xff]
    %v187 = vld [vmem:[#allocation9 + $0x18] sm:$0xff]
    %v188 = vld [vmem:[#allocation9 + $0x20] sm:$0xff]
    %v189 = vld [vmem:[#allocation9 + $0x28] sm:$0xff]
    %v190 = vld [vmem:[#allocation9 + $0x30] sm:$0xff]
    %v191 = vld [vmem:[#allocation9 + $0x38] sm:$0xff]
    %v192 = vadd.f32 %v176, %v184
    %v193 = vadd.f32 %v177, %v185
    %v194 = vadd.f32 %v178, %v186
    %v195 = vadd.f32 %v179, %v187
    %v196 = vadd.f32 %v180, %v188
    %v197 = vadd.f32 %v181, %v189
    %v198 = vadd.f32 %v182, %v190
    %v199 = vadd.f32 %v183, %v191
    %200 = vst [vmem:[#allocation10] sm:$0xff] %v192
    %201 = vst [vmem:[#allocation10 + $0x8] sm:$0xff] %v193
    %202 = vst [vmem:[#allocation10 + $0x10] sm:$0xff] %v194
    %203 = vst [vmem:[#allocation10 + $0x18] sm:$0xff] %v195
    %204 = vst [vmem:[#allocation10 + $0x20] sm:$0xff] %v196
    %205 = vst [vmem:[#allocation10 + $0x28] sm:$0xff] %v197
    %206 = vst [vmem:[#allocation10 + $0x30] sm:$0xff] %v198
    %207 = vst [vmem:[#allocation10 + $0x38] sm:$0xff] %v199
    // Predicated region
    $region26: #{tpu_custom_call.1} parent=1 // pred_check
      _
    $region27: #{tpu_custom_call.1} parent=1 // pred_check_branch
      %209 = sbr.rel (0) target = $region29
    $region28: #{tpu_custom_call.1} parent=1 // pred_region
      %s211 = ssub.s32 1024, 1024
      %212 = vsyncadd [#allocation6], %s211
      %s213 = sshll.u32 [#allocation10], 4
      %s214 = int_to_ptr.vmem [resolvable:$true] %s213
      %219 = dma.vmem_to_hbm [thread:$0]  %s214, 1024, %s4, [#allocation6], 128, 128, 8
    $region29: #{tpu_custom_call.1} parent=1 // pred_fallthru
      _
    // Predicated region
    $region30: #{tpu_custom_call.1} parent=1 // pred_check
      _
    $region31: #{tpu_custom_call.1} parent=1 // pred_check_branch
      %221 = sbr.rel (0) target = $region33
    $region32: #{tpu_custom_call.1} parent=1 // pred_region
      %222 = dma.done [#allocation6], 1024
    $region33: #{tpu_custom_call.1} parent=1 // pred_fallthru
      _
    %223 = vsyncpa [#allocation5], 1
    %224 = vsyncpa [#allocation8], 1
    %225 = vsyncpa [#allocation6], 1

</llo_original>
